<compile_context>
chip_gen: v7x
topology: tpu7x:2x2x1
jax: 0.10.0
libtpu: 0.0.40
codegen_flags: <defaults>
</compile_context>

<pallas_src>
import jax
import jax.numpy as jnp
from jax.experimental import pallas as pl
from jax.experimental.pallas import tpu as pltpu

BATCH_SIZE = 8
HIDDEN_SIZE = 32
TIMESTEPS_EXT = 8
INPUT_SIZE = 1


def rnn_decoder_kernel(x_ref, wih_ref, bias_ref, whh_aug_ref, wdec_ref,
                       bdec_ref, y_ref):
    """Full RNN recurrence + fused linear decoder in one invocation (grid=()).

    x_ref       : (B, T)    f32  batch-first input (trailing size-1 dim dropped)
    wih_ref     : (1, H)    f32  W_ih^T  (input_size = 1)
    bias_ref    : (1, H)    f32  b_ih + b_hh (folded)
    whh_aug_ref : (H, H+1)  f32  [W_hh^T | W_dec^T]  (decoder folded into matmul)
    wdec_ref    : (1, H)    f32  decoder row vector (used only for the last step)
    bdec_ref    : (1, 1)    f32  decoder bias
    y_ref       : (B, T)    f32  batch-first output
    """
    x = x_ref[...]            # (B, T)
    wih = wih_ref[...]        # (1, H)
    bias = bias_ref[...]      # (1, H)
    whh_aug = whh_aug_ref[...]  # (H, H+1)
    wdec = wdec_ref[...]      # (1, H)
    bdec = bdec_ref[...]      # (1, 1)

    B, T = x.shape
    H = wdec.shape[1]

    # Input projection for ALL timesteps, hoisted off the serial recurrence
    # chain. Broadcasts are emitted exactly once (JAX does not CSE
    # broadcast_in_dim), and the per-step xw terms are independent of h so the
    # scheduler can overlap them with the MXU dots.
    wih_b = jnp.broadcast_to(wih, (B, H))
    bias_b = jnp.broadcast_to(bias, (B, H))
    xw = [x[:, t:t + 1] * wih_b + bias_b for t in range(T)]      # T x (B, H)

    # Recurrence, fully unrolled (T small and static). The decoder rides in the
    # free lane padding of the H@W_hh matmul: column H of each dot result is
    # y_{t-1} (pre-bias) at zero extra MXU cost. Only dot + add + tanh remain
    # on the serial chain; hidden state lives in vregs.
    ys = []
    h = jnp.tanh(xw[0])                                           # h_{-1} = 0
    for t in range(1, T):
        d = jnp.dot(h, whh_aug, preferred_element_type=jnp.float32)  # (B, H+1)
        ys.append(d[:, H:H + 1])                                  # y_{t-1} - b_dec
        h = jnp.tanh(xw[t] + d[:, :H])
    # Last output: one tiny VPU multiply + lane reduce on the final hidden state.
    ys.append(jnp.sum(h * wdec, axis=-1, keepdims=True))          # y_{T-1} - b_dec

    # Single full-block store (no per-step 1-lane masked stores).
    y_ref[...] = jnp.concatenate(ys, axis=1) + bdec               # (B, T)


@jax.jit
def model_forward(x, params):
    """x: (B, T, 1) float32 -> y: (B, T, 1) float32 (eval-mode forward)."""
    B, T, _ = x.shape
    H = params["W_hh"].shape[0]

    # Layout glue done once by XLA outside the kernel (tiny 32x32 tensors,
    # includes one 32x32 transpose and the weight concat -- negligible):
    x2d = x.reshape(B, T)                                         # drop trailing 1
    wih = params["W_ih"].reshape(1, H)                            # (H,1) -> (1,H)
    bias = (params["b_ih"] + params["b_hh"]).reshape(1, H)        # folded bias
    whh_aug = jnp.concatenate([params["W_hh"].T,
                               params["W_dec"].T], axis=1)        # (H, H+1)
    wdec = params["W_dec"].reshape(1, H)                          # (1, H)
    bdec = params["b_dec"].reshape(1, 1)                          # (1, 1)

    # ~5 KB of live data: keep grid=(), whole-array VMEM specs. Any grid /
    # BlockSpec tiling / multi-buffering is pure overhead at this size.
    vmem = pl.BlockSpec(memory_space=pltpu.MemorySpace.VMEM)
    y2d = pl.pallas_call(
        rnn_decoder_kernel,
        out_shape=jax.ShapeDtypeStruct((B, T), jnp.float32),
        in_specs=[vmem] * 6,
        out_specs=vmem,
    )(x2d, wih, bias, whh_aug, wdec, bdec)

    return y2d[..., None]                                         # (B, T, 1)


def init_params(key):
    """Deterministic parameter init (xavier-uniform weights, zero RNN biases)."""
    k1, k2, k3, k4 = jax.random.split(key, 4)

    def xavier(k, shape):
        fan_out, fan_in = shape
        bound = jnp.sqrt(6.0 / (fan_in + fan_out))
        return jax.random.uniform(k, shape, jnp.float32, -bound, bound)

    return {
        "W_ih": xavier(k1, (HIDDEN_SIZE, INPUT_SIZE)),            # (H, 1)
        "b_ih": jnp.zeros((HIDDEN_SIZE,), jnp.float32),
        "W_hh": xavier(k2, (HIDDEN_SIZE, HIDDEN_SIZE)),           # (H, H)
        "b_hh": jnp.zeros((HIDDEN_SIZE,), jnp.float32),
        "W_dec": xavier(k3, (1, HIDDEN_SIZE)),                    # (1, H)
        "b_dec": jax.random.uniform(k4, (1,), jnp.float32,
                                    -1.0 / jnp.sqrt(HIDDEN_SIZE),
                                    1.0 / jnp.sqrt(HIDDEN_SIZE)),
    }


def reference_forward(x, params):
    """Pure-JAX reference matching the PyTorch forward (eval mode)."""
    B, T, _ = x.shape
    h = jnp.zeros((B, HIDDEN_SIZE), jnp.float32)
    outs = []
    for t in range(T):
        x_t = x[:, t, :]
        h = jnp.tanh(x_t @ params["W_ih"].T + params["b_ih"]
                     + h @ params["W_hh"].T + params["b_hh"])
        outs.append(h)
    out = jnp.stack(outs, axis=1)                                 # (B, T, H)
    return out @ params["W_dec"].T + params["b_dec"]              # (B, T, 1)


if __name__ == "__main__":
    key = jax.random.PRNGKey(0)
    kp, kx = jax.random.split(key)
    params = init_params(kp)

    # Input consistent with the module: (BATCH_SIZE, TIMESTEPS_EXT, input_size=1)
    x = jax.random.normal(kx, (BATCH_SIZE, TIMESTEPS_EXT, INPUT_SIZE), jnp.float32)

    y = model_forward(x, params)
    y = jax.block_until_ready(y)

    y_ref = reference_forward(x, params)
    assert y.shape == (BATCH_SIZE, TIMESTEPS_EXT, 1)
    assert jnp.allclose(y, y_ref, atol=1e-5, rtol=1e-5)

    print("KERNEL_OK")
</pallas_src>

<mosaic_0001>
module attributes {stable_mosaic.version = 11 : i64} {
  func.func @rnn_decoder_kernel(%arg0: memref<8x8xf32, #tpu.memory_space<vmem>>, %arg1: memref<1x32xf32, #tpu.memory_space<vmem>>, %arg2: memref<1x32xf32, #tpu.memory_space<vmem>>, %arg3: memref<32x33xf32, #tpu.memory_space<vmem>>, %arg4: memref<1x32xf32, #tpu.memory_space<vmem>>, %arg5: memref<1x1xf32, #tpu.memory_space<vmem>>, %arg6: memref<8x8xf32, #tpu.memory_space<vmem>>) attributes {dimension_semantics = [], scalar_prefetch = 0 : i64, scratch_operands = 0 : i64, tpu.core_type = #tpu.core_type<tc>} {
    %c0 = arith.constant 0 : index
    %c0_0 = arith.constant 0 : index
    %0 = vector.load %arg0[%c0, %c0_0] : memref<8x8xf32, #tpu.memory_space<vmem>>, vector<8x8xf32>
    %c0_1 = arith.constant 0 : index
    %c0_2 = arith.constant 0 : index
    %1 = vector.load %arg1[%c0_1, %c0_2] : memref<1x32xf32, #tpu.memory_space<vmem>>, vector<1x32xf32>
    %c0_3 = arith.constant 0 : index
    %c0_4 = arith.constant 0 : index
    %2 = vector.load %arg2[%c0_3, %c0_4] : memref<1x32xf32, #tpu.memory_space<vmem>>, vector<1x32xf32>
    %c0_5 = arith.constant 0 : index
    %c0_6 = arith.constant 0 : index
    %3 = vector.load %arg3[%c0_5, %c0_6] : memref<32x33xf32, #tpu.memory_space<vmem>>, vector<32x33xf32>
    %c0_7 = arith.constant 0 : index
    %c0_8 = arith.constant 0 : index
    %4 = vector.load %arg4[%c0_7, %c0_8] : memref<1x32xf32, #tpu.memory_space<vmem>>, vector<1x32xf32>
    %c0_9 = arith.constant 0 : index
    %c0_10 = arith.constant 0 : index
    %5 = vector.load %arg5[%c0_9, %c0_10] : memref<1x1xf32, #tpu.memory_space<vmem>>, vector<1x1xf32>
    %6 = vector.shape_cast %1 : vector<1x32xf32> to vector<1x32xf32>
    %7 = vector.broadcast %6 : vector<1x32xf32> to vector<8x32xf32>
    %8 = vector.shape_cast %2 : vector<1x32xf32> to vector<1x32xf32>
    %9 = vector.broadcast %8 : vector<1x32xf32> to vector<8x32xf32>
    %10 = vector.extract_strided_slice %0 {offsets = [0, 0], sizes = [8, 1], strides = [1, 1]} : vector<8x8xf32> to vector<8x1xf32>
    %11 = vector.broadcast %10 : vector<8x1xf32> to vector<8x32xf32>
    %12 = arith.mulf %11, %7 : vector<8x32xf32>
    %13 = arith.addf %12, %9 : vector<8x32xf32>
    %14 = vector.extract_strided_slice %0 {offsets = [0, 1], sizes = [8, 1], strides = [1, 1]} : vector<8x8xf32> to vector<8x1xf32>
    %15 = vector.broadcast %14 : vector<8x1xf32> to vector<8x32xf32>
    %16 = arith.mulf %15, %7 : vector<8x32xf32>
    %17 = arith.addf %16, %9 : vector<8x32xf32>
    %18 = vector.extract_strided_slice %0 {offsets = [0, 2], sizes = [8, 1], strides = [1, 1]} : vector<8x8xf32> to vector<8x1xf32>
    %19 = vector.broadcast %18 : vector<8x1xf32> to vector<8x32xf32>
    %20 = arith.mulf %19, %7 : vector<8x32xf32>
    %21 = arith.addf %20, %9 : vector<8x32xf32>
    %22 = vector.extract_strided_slice %0 {offsets = [0, 3], sizes = [8, 1], strides = [1, 1]} : vector<8x8xf32> to vector<8x1xf32>
    %23 = vector.broadcast %22 : vector<8x1xf32> to vector<8x32xf32>
    %24 = arith.mulf %23, %7 : vector<8x32xf32>
    %25 = arith.addf %24, %9 : vector<8x32xf32>
    %26 = vector.extract_strided_slice %0 {offsets = [0, 4], sizes = [8, 1], strides = [1, 1]} : vector<8x8xf32> to vector<8x1xf32>
    %27 = vector.broadcast %26 : vector<8x1xf32> to vector<8x32xf32>
    %28 = arith.mulf %27, %7 : vector<8x32xf32>
    %29 = arith.addf %28, %9 : vector<8x32xf32>
    %30 = vector.extract_strided_slice %0 {offsets = [0, 5], sizes = [8, 1], strides = [1, 1]} : vector<8x8xf32> to vector<8x1xf32>
    %31 = vector.broadcast %30 : vector<8x1xf32> to vector<8x32xf32>
    %32 = arith.mulf %31, %7 : vector<8x32xf32>
    %33 = arith.addf %32, %9 : vector<8x32xf32>
    %34 = vector.extract_strided_slice %0 {offsets = [0, 6], sizes = [8, 1], strides = [1, 1]} : vector<8x8xf32> to vector<8x1xf32>
    %35 = vector.broadcast %34 : vector<8x1xf32> to vector<8x32xf32>
    %36 = arith.mulf %35, %7 : vector<8x32xf32>
    %37 = arith.addf %36, %9 : vector<8x32xf32>
    %38 = vector.extract_strided_slice %0 {offsets = [0, 7], sizes = [8, 1], strides = [1, 1]} : vector<8x8xf32> to vector<8x1xf32>
    %39 = vector.broadcast %38 : vector<8x1xf32> to vector<8x32xf32>
    %40 = arith.mulf %39, %7 : vector<8x32xf32>
    %41 = arith.addf %40, %9 : vector<8x32xf32>
    %42 = math.tanh %13 : vector<8x32xf32>
    %cst = arith.constant dense<0.000000e+00> : vector<8x33xf32>
    %43 = tpu.matmul %42, %3, %cst {dimension_numbers = #tpu.dot_dimension_numbers<[1], [0], [0], [1], [0, 0, 1, 1], [], []>} : vector<8x32xf32>, vector<32x33xf32>, vector<8x33xf32> -> vector<8x33xf32>
    %44 = vector.extract_strided_slice %43 {offsets = [0, 32], sizes = [8, 1], strides = [1, 1]} : vector<8x33xf32> to vector<8x1xf32>
    %45 = vector.extract_strided_slice %43 {offsets = [0, 0], sizes = [8, 32], strides = [1, 1]} : vector<8x33xf32> to vector<8x32xf32>
    %46 = arith.addf %17, %45 : vector<8x32xf32>
    %47 = math.tanh %46 : vector<8x32xf32>
    %cst_11 = arith.constant dense<0.000000e+00> : vector<8x33xf32>
    %48 = tpu.matmul %47, %3, %cst_11 {dimension_numbers = #tpu.dot_dimension_numbers<[1], [0], [0], [1], [0, 0, 1, 1], [], []>} : vector<8x32xf32>, vector<32x33xf32>, vector<8x33xf32> -> vector<8x33xf32>
    %49 = vector.extract_strided_slice %48 {offsets = [0, 32], sizes = [8, 1], strides = [1, 1]} : vector<8x33xf32> to vector<8x1xf32>
    %50 = vector.extract_strided_slice %48 {offsets = [0, 0], sizes = [8, 32], strides = [1, 1]} : vector<8x33xf32> to vector<8x32xf32>
    %51 = arith.addf %21, %50 : vector<8x32xf32>
    %52 = math.tanh %51 : vector<8x32xf32>
    %cst_12 = arith.constant dense<0.000000e+00> : vector<8x33xf32>
    %53 = tpu.matmul %52, %3, %cst_12 {dimension_numbers = #tpu.dot_dimension_numbers<[1], [0], [0], [1], [0, 0, 1, 1], [], []>} : vector<8x32xf32>, vector<32x33xf32>, vector<8x33xf32> -> vector<8x33xf32>
    %54 = vector.extract_strided_slice %53 {offsets = [0, 32], sizes = [8, 1], strides = [1, 1]} : vector<8x33xf32> to vector<8x1xf32>
    %55 = vector.extract_strided_slice %53 {offsets = [0, 0], sizes = [8, 32], strides = [1, 1]} : vector<8x33xf32> to vector<8x32xf32>
    %56 = arith.addf %25, %55 : vector<8x32xf32>
    %57 = math.tanh %56 : vector<8x32xf32>
    %cst_13 = arith.constant dense<0.000000e+00> : vector<8x33xf32>
    %58 = tpu.matmul %57, %3, %cst_13 {dimension_numbers = #tpu.dot_dimension_numbers<[1], [0], [0], [1], [0, 0, 1, 1], [], []>} : vector<8x32xf32>, vector<32x33xf32>, vector<8x33xf32> -> vector<8x33xf32>
    %59 = vector.extract_strided_slice %58 {offsets = [0, 32], sizes = [8, 1], strides = [1, 1]} : vector<8x33xf32> to vector<8x1xf32>
    %60 = vector.extract_strided_slice %58 {offsets = [0, 0], sizes = [8, 32], strides = [1, 1]} : vector<8x33xf32> to vector<8x32xf32>
    %61 = arith.addf %29, %60 : vector<8x32xf32>
    %62 = math.tanh %61 : vector<8x32xf32>
    %cst_14 = arith.constant dense<0.000000e+00> : vector<8x33xf32>
    %63 = tpu.matmul %62, %3, %cst_14 {dimension_numbers = #tpu.dot_dimension_numbers<[1], [0], [0], [1], [0, 0, 1, 1], [], []>} : vector<8x32xf32>, vector<32x33xf32>, vector<8x33xf32> -> vector<8x33xf32>
    %64 = vector.extract_strided_slice %63 {offsets = [0, 32], sizes = [8, 1], strides = [1, 1]} : vector<8x33xf32> to vector<8x1xf32>
    %65 = vector.extract_strided_slice %63 {offsets = [0, 0], sizes = [8, 32], strides = [1, 1]} : vector<8x33xf32> to vector<8x32xf32>
    %66 = arith.addf %33, %65 : vector<8x32xf32>
    %67 = math.tanh %66 : vector<8x32xf32>
    %cst_15 = arith.constant dense<0.000000e+00> : vector<8x33xf32>
    %68 = tpu.matmul %67, %3, %cst_15 {dimension_numbers = #tpu.dot_dimension_numbers<[1], [0], [0], [1], [0, 0, 1, 1], [], []>} : vector<8x32xf32>, vector<32x33xf32>, vector<8x33xf32> -> vector<8x33xf32>
    %69 = vector.extract_strided_slice %68 {offsets = [0, 32], sizes = [8, 1], strides = [1, 1]} : vector<8x33xf32> to vector<8x1xf32>
    %70 = vector.extract_strided_slice %68 {offsets = [0, 0], sizes = [8, 32], strides = [1, 1]} : vector<8x33xf32> to vector<8x32xf32>
    %71 = arith.addf %37, %70 : vector<8x32xf32>
    %72 = math.tanh %71 : vector<8x32xf32>
    %cst_16 = arith.constant dense<0.000000e+00> : vector<8x33xf32>
    %73 = tpu.matmul %72, %3, %cst_16 {dimension_numbers = #tpu.dot_dimension_numbers<[1], [0], [0], [1], [0, 0, 1, 1], [], []>} : vector<8x32xf32>, vector<32x33xf32>, vector<8x33xf32> -> vector<8x33xf32>
    %74 = vector.extract_strided_slice %73 {offsets = [0, 32], sizes = [8, 1], strides = [1, 1]} : vector<8x33xf32> to vector<8x1xf32>
    %75 = vector.extract_strided_slice %73 {offsets = [0, 0], sizes = [8, 32], strides = [1, 1]} : vector<8x33xf32> to vector<8x32xf32>
    %76 = arith.addf %41, %75 : vector<8x32xf32>
    %77 = math.tanh %76 : vector<8x32xf32>
    %78 = vector.broadcast %4 : vector<1x32xf32> to vector<8x32xf32>
    %79 = arith.mulf %77, %78 : vector<8x32xf32>
    %cst_17 = arith.constant dense<0.000000e+00> : vector<8xf32>
    %80 = vector.multi_reduction <add>, %79, %cst_17 [1] : vector<8x32xf32> to vector<8xf32>
    %81 = vector.shape_cast %80 : vector<8xf32> to vector<8x1xf32>
    %82 = tpu.concatenate %44, %49, %54, %59, %64, %69, %74, %81 in 1 : vector<8x1xf32>, vector<8x1xf32>, vector<8x1xf32>, vector<8x1xf32>, vector<8x1xf32>, vector<8x1xf32>, vector<8x1xf32>, vector<8x1xf32> -> vector<8x8xf32>
    %83 = vector.broadcast %5 : vector<1x1xf32> to vector<8x8xf32>
    %84 = arith.addf %82, %83 : vector<8x8xf32>
    %c0_18 = arith.constant 0 : index
    %c0_19 = arith.constant 0 : index
    %85 = vector.load %arg6[%c0_18, %c0_19] : memref<8x8xf32, #tpu.memory_space<vmem>>, vector<8x8xf32>
    tpu.vector_store %arg6[%c0_18, %c0_19], %84 {strides = array<i32>} : memref<8x8xf32, #tpu.memory_space<vmem>>, vector<8x8xf32>,
    return
  }
}

</mosaic_0001>

<llo_original>
// kernel: model_forward.1
$region0: #{model_forward.1}
  #allocation0 [shape = 'u32[]', space=smem, size = 0x4, offset = 0x4, fixed_abs, tag = 'smem constant byte address 0x4 - core index']
  #allocation1 [shape = 'u32[144,128]{1,0:T(1,128)}', space=vmem, size = 0x12000, scoped, tag = 'internal scratch']
  #allocation2 [shape = 'f32[1,1]{1,0:T(1,128)S(1)}', space=vmem, size = 0x200, scoped, tag = 'scoped memory for model_forward.1']
  %s0 = inlined_call_operand.vmem [shape: f32[8,8], index: 0, kind: input, shape index: {}]
  %s1 = inlined_call_operand.vmem [shape: f32[1,32], index: 1, kind: input, shape index: {}]
  %s2 = inlined_call_operand.vmem [shape: f32[1,32], index: 2, kind: input, shape index: {}]
  %s3 = inlined_call_operand.vmem [shape: f32[32,33], index: 3, kind: input, shape index: {}]
  %s4 = inlined_call_operand.vmem [shape: f32[1,32], index: 4, kind: input, shape index: {}]
  %s5 = inlined_call_operand.<no memory space> [shape: f32[1,1], index: 5, kind: input, shape index: {}]
  %s6 = inlined_call_operand.hbm [shape: f32[8,8], index: 6, kind: output, shape index: {}]
  %s7 = sld [smem:[#allocation0]]
  $region34: #{model_forward.1} parent=0
    _
  %s9 = ssub.s32 1, %s7
  %s10 = scalar_select 0, %s9, %s7
  %v11 = vstv %s5
  %12 = vst [vmem:[#allocation2] sm:$0x1] %v11
  $region1: #{model_forward.1} parent=0
    #allocation3 [shape = 'u8[4096]{0}', space=vmem, size = 0x1000, scoped, tag = 'output window, operand 0, single buffered']
    #allocation4 [shape = 's32[1]{0}', space=sflag, size = 0x4, scoped, tag = 'scoped memory for model_forward.1']
    %13 = vsyncpa [#allocation4], 0
    // Predicated region
    $region2: #{model_forward.1} parent=1 // pred_check
      _
    $region3: #{model_forward.1} parent=1 // pred_check_branch
      %15 = sbr.rel (0) target = $region5
    $region4: #{model_forward.1} parent=1 // pred_region
      _
    $region5: #{model_forward.1} parent=1 // pred_fallthru
      _
    // Predicated region
    $region6: #{model_forward.1} parent=1 // pred_check
      _
    $region7: #{model_forward.1} parent=1 // pred_check_branch
      %17 = sbr.rel (0) target = $region9
    $region8: #{model_forward.1} parent=1 // pred_region
      _
    $region9: #{model_forward.1} parent=1 // pred_fallthru
      _
    // Predicated region
    $region10: #{model_forward.1} parent=1 // pred_check
      _
    $region11: #{model_forward.1} parent=1 // pred_check_branch
      %19 = sbr.rel (0) target = $region13
    $region12: #{model_forward.1} parent=1 // pred_region
      _
    $region13: #{model_forward.1} parent=1 // pred_fallthru
      _
    // Predicated region
    $region14: #{model_forward.1} parent=1 // pred_check
      _
    $region15: #{model_forward.1} parent=1 // pred_check_branch
      %21 = sbr.rel (0) target = $region17
    $region16: #{model_forward.1} parent=1 // pred_region
      _
    $region17: #{model_forward.1} parent=1 // pred_fallthru
      _
    // Predicated region
    $region18: #{model_forward.1} parent=1 // pred_check
      _
    $region19: #{model_forward.1} parent=1 // pred_check_branch
      %23 = sbr.rel (0) target = $region21
    $region20: #{model_forward.1} parent=1 // pred_region
      _
    $region21: #{model_forward.1} parent=1 // pred_fallthru
      _
    // Predicated region
    $region22: #{model_forward.1} parent=1 // pred_check
      _
    $region23: #{model_forward.1} parent=1 // pred_check_branch
      %25 = sbr.rel (0) target = $region25
    $region24: #{model_forward.1} parent=1 // pred_region
      _
    $region25: #{model_forward.1} parent=1 // pred_fallthru
      _
    %v26 = vld [vmem:[%s0] sm:$0xff]
    %v27 = vld [vmem:[%s1] sm:$0x1]
    %v28 = vld [vmem:[%s2] sm:$0x1]
    %v29 = vld [vmem:[%s3] sm:$0xff]
    %v30 = vld [vmem:[%s3 + $0x8] sm:$0xff]
    %v31 = vld [vmem:[%s3 + $0x10] sm:$0xff]
    %v32 = vld [vmem:[%s3 + $0x18] sm:$0xff]
    %v33 = vld [vmem:[%s4] sm:$0x1]
    %v34 = vld [vmem:[#allocation2] sm:$0x1]
    %v36 = vlaneseq
    %v37 = vshrl.u32 %v36, 7
    %v38 = vsub.s32 0, %v37
    %v39 = vrot.slane %v27, %v38
    %v42 = vlaneseq
    %v43 = vshrl.u32 %v42, 7
    %v44 = vsub.s32 0, %v43
    %v45 = vrot.slane %v28, %v44
    %48 = vset.pattern.permute.xlu0 0
    %49 = vperm.xlu0 %48, %v26
    %v50 = vpop.permute.xlu0 %49
    %v52 = vmul.f32 %v50, %v39
    %v53 = vadd.f32 %v52, %v45
    %54 = vset.pattern.permute.xlu0 1
    %55 = vperm.xlu0 %54, %v26
    %v56 = vpop.permute.xlu0 %55
    %v58 = vmul.f32 %v56, %v39
    %v59 = vadd.f32 %v58, %v45
    %60 = vset.pattern.permute.xlu0 2
    %61 = vperm.xlu0 %60, %v26
    %v62 = vpop.permute.xlu0 %61
    %v64 = vmul.f32 %v62, %v39
    %v65 = vadd.f32 %v64, %v45
    %66 = vset.pattern.permute.xlu0 3
    %67 = vperm.xlu0 %66, %v26
    %v68 = vpop.permute.xlu0 %67
    %v70 = vmul.f32 %v68, %v39
    %v71 = vadd.f32 %v70, %v45
    %72 = vset.pattern.permute.xlu0 4
    %73 = vperm.xlu0 %72, %v26
    %v74 = vpop.permute.xlu0 %73
    %v76 = vmul.f32 %v74, %v39
    %v77 = vadd.f32 %v76, %v45
    %78 = vset.pattern.permute.xlu0 5
    %79 = vperm.xlu0 %78, %v26
    %v80 = vpop.permute.xlu0 %79
    %v82 = vmul.f32 %v80, %v39
    %v83 = vadd.f32 %v82, %v45
    %84 = vset.pattern.permute.xlu0 6
    %85 = vperm.xlu0 %84, %v26
    %v86 = vpop.permute.xlu0 %85
    %v88 = vmul.f32 %v86, %v39
    %v89 = vadd.f32 %v88, %v45
    %90 = vset.pattern.permute.xlu0 7
    %91 = vperm.xlu0 %90, %v26
    %v92 = vpop.permute.xlu0 %91
    %v94 = vmul.f32 %v92, %v39
    %v95 = vadd.f32 %v94, %v45
    %v96 = vtanh.pop %v53
    %vm97 = vcmask 261120
    %v99 = vsel %vm97, %v96, 0
    %101 = vmatprep.subr.mxu0 0.0
    %102 = vmatpush1.msra.mxu0 %v29
    %103 = vmatprep.subr.mxu0 0.0
    %104 = vmatpush1.msra.mxu0 %v30
    %105 = vmatprep.subr.mxu0 0.0
    %106 = vmatpush1.msra.mxu0 %v31
    %107 = vmatprep.subr.mxu0 0.0
    %108 = vmatpush1.msra.mxu0 %v32
    %109 = vmatprep.subr.mxu0 0.0
    %110 = vmatpush1.msra.mxu0 0.0
    %111 = vmatprep.subr.mxu0 0.0
    %112 = vmatpush1.msra.mxu0 0.0
    %113 = vmatprep.subr.mxu0 0.0
    %114 = vmatpush1.msra.mxu0 0.0
    %115 = vmatprep.subr.mxu0 0.0
    %116 = vmatpush1.msra.mxu0 0.0
    %117 = vmatprep.subr.mxu0 0.0
    %118 = vmatpush1.msra.mxu0 0.0
    %119 = vmatprep.subr.mxu0 0.0
    %120 = vmatpush1.msra.mxu0 0.0
    %121 = vmatprep.subr.mxu0 0.0
    %122 = vmatpush1.msra.mxu0 0.0
    %123 = vmatprep.subr.mxu0 0.0
    %124 = vmatpush1.msra.mxu0 0.0
    %125 = vmatprep.subr.mxu0 0.0
    %126 = vmatpush1.msra.mxu0 0.0
    %127 = vmatprep.subr.mxu0 0.0
    %128 = vmatpush1.msra.mxu0 0.0
    %129 = vmatprep.subr.mxu0 0.0
    %130 = vmatpush1.msra.mxu0 0.0
    %131 = vmatprep.subr.mxu0 0.0
    %132 = vmatpush1.msra.mxu0 0.0
    %133 = vmatprep.subr.mxu0 0.0
    %134 = vmatpush1.msra.mxu0 0.0
    %135 = vmatprep.subr.mxu0 0.0
    %136 = vmatpush1.msra.mxu0 0.0
    %137 = vmatprep.subr.mxu0 0.0
    %138 = vmatpush1.msra.mxu0 0.0
    %139 = vmatprep.subr.mxu0 0.0
    %140 = vmatpush1.msra.mxu0 0.0
    %141 = vmatprep.subr.mxu0 0.0
    %142 = vmatpush1.msra.mxu0 0.0
    %143 = vmatprep.subr.mxu0 0.0
    %144 = vmatpush1.msra.mxu0 0.0
    %145 = vmatprep.subr.mxu0 0.0
    %146 = vmatpush1.msra.mxu0 0.0
    %147 = vmatprep.subr.mxu0 0.0
    %148 = vmatpush1.msra.mxu0 0.0
    %149 = vmatprep.subr.mxu0 0.0
    %150 = vmatpush1.msra.mxu0 0.0
    %151 = vmatprep.subr.mxu0 0.0
    %152 = vmatpush1.msra.mxu0 0.0
    %153 = vmatprep.subr.mxu0 0.0
    %154 = vmatpush1.msra.mxu0 0.0
    %155 = vmatprep.subr.mxu0 0.0
    %156 = vmatpush1.msra.mxu0 0.0
    %157 = vmatprep.subr.mxu0 0.0
    %158 = vmatpush1.msra.mxu0 0.0
    %159 = vmatprep.subr.mxu0 0.0
    %160 = vmatpush1.msra.mxu0 0.0
    %161 = vmatprep.subr.mxu0 0.0
    %162 = vmatpush1.msra.mxu0 0.0
    %163 = vmatprep.subr.mxu0 0.0
    %164 = vmatpush1.msra.mxu0 0.0
    %165 = vmatprep.mubr.f32.mxu0 0.0
    %166 = vmatmul.mubr.f32.gmra.mrb[0].mxu0 %v99
    %v167 = vpop.f32.mrb[0].mxu0
    %v168 = vadd.f32 0.0, %v167
    %v169 = vpop.f32.mrb[0].mxu0
    %170 = vdwg.mxu0
    %v171 = vadd.f32 %v59, %v168
    %v172 = vtanh.pop %v171
    %v174 = vsel %vm97, %v172, 0
    %176 = vmatprep.subr.mxu0 0.0
    %177 = vmatpush1.msra.mxu0 %v29
    %178 = vmatprep.subr.mxu0 0.0
    %179 = vmatpush1.msra.mxu0 %v30
    %180 = vmatprep.subr.mxu0 0.0
    %181 = vmatpush1.msra.mxu0 %v31
    %182 = vmatprep.subr.mxu0 0.0
    %183 = vmatpush1.msra.mxu0 %v32
    %184 = vmatprep.subr.mxu0 0.0
    %185 = vmatpush1.msra.mxu0 0.0
    %186 = vmatprep.subr.mxu0 0.0
    %187 = vmatpush1.msra.mxu0 0.0
    %188 = vmatprep.subr.mxu0 0.0
    %189 = vmatpush1.msra.mxu0 0.0
    %190 = vmatprep.subr.mxu0 0.0
    %191 = vmatpush1.msra.mxu0 0.0
    %192 = vmatprep.subr.mxu0 0.0
    %193 = vmatpush1.msra.mxu0 0.0
    %194 = vmatprep.subr.mxu0 0.0
    %195 = vmatpush1.msra.mxu0 0.0
    %196 = vmatprep.subr.mxu0 0.0
    %197 = vmatpush1.msra.mxu0 0.0
    %198 = vmatprep.subr.mxu0 0.0
    %199 = vmatpush1.msra.mxu0 0.0
    %200 = vmatprep.subr.mxu0 0.0
    %201 = vmatpush1.msra.mxu0 0.0
    %202 = vmatprep.subr.mxu0 0.0
    %203 = vmatpush1.msra.mxu0 0.0
    %204 = vmatprep.subr.mxu0 0.0
    %205 = vmatpush1.msra.mxu0 0.0
    %206 = vmatprep.subr.mxu0 0.0
    %207 = vmatpush1.msra.mxu0 0.0
    %208 = vmatprep.subr.mxu0 0.0
    %209 = vmatpush1.msra.mxu0 0.0
    %210 = vmatprep.subr.mxu0 0.0
    %211 = vmatpush1.msra.mxu0 0.0
    %212 = vmatprep.subr.mxu0 0.0
    %213 = vmatpush1.msra.mxu0 0.0
    %214 = vmatprep.subr.mxu0 0.0
    %215 = vmatpush1.msra.mxu0 0.0
    %216 = vmatprep.subr.mxu0 0.0
    %217 = vmatpush1.msra.mxu0 0.0
    %218 = vmatprep.subr.mxu0 0.0
    %219 = vmatpush1.msra.mxu0 0.0
    %220 = vmatprep.subr.mxu0 0.0
    %221 = vmatpush1.msra.mxu0 0.0
    %222 = vmatprep.subr.mxu0 0.0
    %223 = vmatpush1.msra.mxu0 0.0
    %224 = vmatprep.subr.mxu0 0.0
    %225 = vmatpush1.msra.mxu0 0.0
    %226 = vmatprep.subr.mxu0 0.0
    %227 = vmatpush1.msra.mxu0 0.0
    %228 = vmatprep.subr.mxu0 0.0
    %229 = vmatpush1.msra.mxu0 0.0
    %230 = vmatprep.subr.mxu0 0.0
    %231 = vmatpush1.msra.mxu0 0.0
    %232 = vmatprep.subr.mxu0 0.0
    %233 = vmatpush1.msra.mxu0 0.0
    %234 = vmatprep.subr.mxu0 0.0
    %235 = vmatpush1.msra.mxu0 0.0
    %236 = vmatprep.subr.mxu0 0.0
    %237 = vmatpush1.msra.mxu0 0.0
    %238 = vmatprep.subr.mxu0 0.0
    %239 = vmatpush1.msra.mxu0 0.0
    %240 = vmatprep.mubr.f32.mxu0 0.0
    %241 = vmatmul.mubr.f32.gmra.mrb[0].mxu0 %v174
    %v242 = vpop.f32.mrb[0].mxu0
    %v243 = vadd.f32 0.0, %v242
    %v244 = vpop.f32.mrb[0].mxu0
    %245 = vdwg.mxu0
    %v246 = vadd.f32 %v65, %v243
    %v247 = vtanh.pop %v246
    %v249 = vsel %vm97, %v247, 0
    %251 = vmatprep.subr.mxu0 0.0
    %252 = vmatpush1.msra.mxu0 %v29
    %253 = vmatprep.subr.mxu0 0.0
    %254 = vmatpush1.msra.mxu0 %v30
    %255 = vmatprep.subr.mxu0 0.0
    %256 = vmatpush1.msra.mxu0 %v31
    %257 = vmatprep.subr.mxu0 0.0
    %258 = vmatpush1.msra.mxu0 %v32
    %259 = vmatprep.subr.mxu0 0.0
    %260 = vmatpush1.msra.mxu0 0.0
    %261 = vmatprep.subr.mxu0 0.0
    %262 = vmatpush1.msra.mxu0 0.0
    %263 = vmatprep.subr.mxu0 0.0
    %264 = vmatpush1.msra.mxu0 0.0
    %265 = vmatprep.subr.mxu0 0.0
    %266 = vmatpush1.msra.mxu0 0.0
    %267 = vmatprep.subr.mxu0 0.0
    %268 = vmatpush1.msra.mxu0 0.0
    %269 = vmatprep.subr.mxu0 0.0
    %270 = vmatpush1.msra.mxu0 0.0
    %271 = vmatprep.subr.mxu0 0.0
    %272 = vmatpush1.msra.mxu0 0.0
    %273 = vmatprep.subr.mxu0 0.0
    %274 = vmatpush1.msra.mxu0 0.0
    %275 = vmatprep.subr.mxu0 0.0
    %276 = vmatpush1.msra.mxu0 0.0
    %277 = vmatprep.subr.mxu0 0.0
    %278 = vmatpush1.msra.mxu0 0.0
    %279 = vmatprep.subr.mxu0 0.0
    %280 = vmatpush1.msra.mxu0 0.0
    %281 = vmatprep.subr.mxu0 0.0
    %282 = vmatpush1.msra.mxu0 0.0
    %283 = vmatprep.subr.mxu0 0.0
    %284 = vmatpush1.msra.mxu0 0.0
    %285 = vmatprep.subr.mxu0 0.0
    %286 = vmatpush1.msra.mxu0 0.0
    %287 = vmatprep.subr.mxu0 0.0
    %288 = vmatpush1.msra.mxu0 0.0
    %289 = vmatprep.subr.mxu0 0.0
    %290 = vmatpush1.msra.mxu0 0.0
    %291 = vmatprep.subr.mxu0 0.0
    %292 = vmatpush1.msra.mxu0 0.0
    %293 = vmatprep.subr.mxu0 0.0
    %294 = vmatpush1.msra.mxu0 0.0
    %295 = vmatprep.subr.mxu0 0.0
    %296 = vmatpush1.msra.mxu0 0.0
    %297 = vmatprep.subr.mxu0 0.0
    %298 = vmatpush1.msra.mxu0 0.0
    %299 = vmatprep.subr.mxu0 0.0
    %300 = vmatpush1.msra.mxu0 0.0
    %301 = vmatprep.subr.mxu0 0.0
    %302 = vmatpush1.msra.mxu0 0.0
    %303 = vmatprep.subr.mxu0 0.0
    %304 = vmatpush1.msra.mxu0 0.0
    %305 = vmatprep.subr.mxu0 0.0
    %306 = vmatpush1.msra.mxu0 0.0
    %307 = vmatprep.subr.mxu0 0.0
    %308 = vmatpush1.msra.mxu0 0.0
    %309 = vmatprep.subr.mxu0 0.0
    %310 = vmatpush1.msra.mxu0 0.0
    %311 = vmatprep.subr.mxu0 0.0
    %312 = vmatpush1.msra.mxu0 0.0
    %313 = vmatprep.subr.mxu0 0.0
    %314 = vmatpush1.msra.mxu0 0.0
    %315 = vmatprep.mubr.f32.mxu0 0.0
    %316 = vmatmul.mubr.f32.gmra.mrb[0].mxu0 %v249
    %v317 = vpop.f32.mrb[0].mxu0
    %v318 = vadd.f32 0.0, %v317
    %v319 = vpop.f32.mrb[0].mxu0
    %320 = vdwg.mxu0
    %v321 = vadd.f32 %v71, %v318
    %v322 = vtanh.pop %v321
    %v324 = vsel %vm97, %v322, 0
    %326 = vmatprep.subr.mxu0 0.0
    %327 = vmatpush1.msra.mxu0 %v29
    %328 = vmatprep.subr.mxu0 0.0
    %329 = vmatpush1.msra.mxu0 %v30
    %330 = vmatprep.subr.mxu0 0.0
    %331 = vmatpush1.msra.mxu0 %v31
    %332 = vmatprep.subr.mxu0 0.0
    %333 = vmatpush1.msra.mxu0 %v32
    %334 = vmatprep.subr.mxu0 0.0
    %335 = vmatpush1.msra.mxu0 0.0
    %336 = vmatprep.subr.mxu0 0.0
    %337 = vmatpush1.msra.mxu0 0.0
    %338 = vmatprep.subr.mxu0 0.0
    %339 = vmatpush1.msra.mxu0 0.0
    %340 = vmatprep.subr.mxu0 0.0
    %341 = vmatpush1.msra.mxu0 0.0
    %342 = vmatprep.subr.mxu0 0.0
    %343 = vmatpush1.msra.mxu0 0.0
    %344 = vmatprep.subr.mxu0 0.0
    %345 = vmatpush1.msra.mxu0 0.0
    %346 = vmatprep.subr.mxu0 0.0
    %347 = vmatpush1.msra.mxu0 0.0
    %348 = vmatprep.subr.mxu0 0.0
    %349 = vmatpush1.msra.mxu0 0.0
    %350 = vmatprep.subr.mxu0 0.0
    %351 = vmatpush1.msra.mxu0 0.0
    %352 = vmatprep.subr.mxu0 0.0
    %353 = vmatpush1.msra.mxu0 0.0
    %354 = vmatprep.subr.mxu0 0.0
    %355 = vmatpush1.msra.mxu0 0.0
    %356 = vmatprep.subr.mxu0 0.0
    %357 = vmatpush1.msra.mxu0 0.0
    %358 = vmatprep.subr.mxu0 0.0
    %359 = vmatpush1.msra.mxu0 0.0
    %360 = vmatprep.subr.mxu0 0.0
    %361 = vmatpush1.msra.mxu0 0.0
    %362 = vmatprep.subr.mxu0 0.0
    %363 = vmatpush1.msra.mxu0 0.0
    %364 = vmatprep.subr.mxu0 0.0
    %365 = vmatpush1.msra.mxu0 0.0
    %366 = vmatprep.subr.mxu0 0.0
    %367 = vmatpush1.msra.mxu0 0.0
    %368 = vmatprep.subr.mxu0 0.0
    %369 = vmatpush1.msra.mxu0 0.0
    %370 = vmatprep.subr.mxu0 0.0
    %371 = vmatpush1.msra.mxu0 0.0
    %372 = vmatprep.subr.mxu0 0.0
    %373 = vmatpush1.msra.mxu0 0.0
    %374 = vmatprep.subr.mxu0 0.0
    %375 = vmatpush1.msra.mxu0 0.0
    %376 = vmatprep.subr.mxu0 0.0
    %377 = vmatpush1.msra.mxu0 0.0
    %378 = vmatprep.subr.mxu0 0.0
    %379 = vmatpush1.msra.mxu0 0.0
    %380 = vmatprep.subr.mxu0 0.0
    %381 = vmatpush1.msra.mxu0 0.0
    %382 = vmatprep.subr.mxu0 0.0
    %383 = vmatpush1.msra.mxu0 0.0
    %384 = vmatprep.subr.mxu0 0.0
    %385 = vmatpush1.msra.mxu0 0.0
    %386 = vmatprep.subr.mxu0 0.0
    %387 = vmatpush1.msra.mxu0 0.0
    %388 = vmatprep.subr.mxu0 0.0
    %389 = vmatpush1.msra.mxu0 0.0
    %390 = vmatprep.mubr.f32.mxu0 0.0
    %391 = vmatmul.mubr.f32.gmra.mrb[0].mxu0 %v324
    %v392 = vpop.f32.mrb[0].mxu0
    %v393 = vadd.f32 0.0, %v392
    %v394 = vpop.f32.mrb[0].mxu0
    %395 = vdwg.mxu0
    %v396 = vadd.f32 %v77, %v393
    %v397 = vtanh.pop %v396
    %v399 = vsel %vm97, %v397, 0
    %401 = vmatprep.subr.mxu0 0.0
    %402 = vmatpush1.msra.mxu0 %v29
    %403 = vmatprep.subr.mxu0 0.0
    %404 = vmatpush1.msra.mxu0 %v30
    %405 = vmatprep.subr.mxu0 0.0
    %406 = vmatpush1.msra.mxu0 %v31
    %407 = vmatprep.subr.mxu0 0.0
    %408 = vmatpush1.msra.mxu0 %v32
    %409 = vmatprep.subr.mxu0 0.0
    %410 = vmatpush1.msra.mxu0 0.0
    %411 = vmatprep.subr.mxu0 0.0
    %412 = vmatpush1.msra.mxu0 0.0
    %413 = vmatprep.subr.mxu0 0.0
    %414 = vmatpush1.msra.mxu0 0.0
    %415 = vmatprep.subr.mxu0 0.0
    %416 = vmatpush1.msra.mxu0 0.0
    %417 = vmatprep.subr.mxu0 0.0
    %418 = vmatpush1.msra.mxu0 0.0
    %419 = vmatprep.subr.mxu0 0.0
    %420 = vmatpush1.msra.mxu0 0.0
    %421 = vmatprep.subr.mxu0 0.0
    %422 = vmatpush1.msra.mxu0 0.0
    %423 = vmatprep.subr.mxu0 0.0
    %424 = vmatpush1.msra.mxu0 0.0
    %425 = vmatprep.subr.mxu0 0.0
    %426 = vmatpush1.msra.mxu0 0.0
    %427 = vmatprep.subr.mxu0 0.0
    %428 = vmatpush1.msra.mxu0 0.0
    %429 = vmatprep.subr.mxu0 0.0
    %430 = vmatpush1.msra.mxu0 0.0
    %431 = vmatprep.subr.mxu0 0.0
    %432 = vmatpush1.msra.mxu0 0.0
    %433 = vmatprep.subr.mxu0 0.0
    %434 = vmatpush1.msra.mxu0 0.0
    %435 = vmatprep.subr.mxu0 0.0
    %436 = vmatpush1.msra.mxu0 0.0
    %437 = vmatprep.subr.mxu0 0.0
    %438 = vmatpush1.msra.mxu0 0.0
    %439 = vmatprep.subr.mxu0 0.0
    %440 = vmatpush1.msra.mxu0 0.0
    %441 = vmatprep.subr.mxu0 0.0
    %442 = vmatpush1.msra.mxu0 0.0
    %443 = vmatprep.subr.mxu0 0.0
    %444 = vmatpush1.msra.mxu0 0.0
    %445 = vmatprep.subr.mxu0 0.0
    %446 = vmatpush1.msra.mxu0 0.0
    %447 = vmatprep.subr.mxu0 0.0
    %448 = vmatpush1.msra.mxu0 0.0
    %449 = vmatprep.subr.mxu0 0.0
    %450 = vmatpush1.msra.mxu0 0.0
    %451 = vmatprep.subr.mxu0 0.0
    %452 = vmatpush1.msra.mxu0 0.0
    %453 = vmatprep.subr.mxu0 0.0
    %454 = vmatpush1.msra.mxu0 0.0
    %455 = vmatprep.subr.mxu0 0.0
    %456 = vmatpush1.msra.mxu0 0.0
    %457 = vmatprep.subr.mxu0 0.0
    %458 = vmatpush1.msra.mxu0 0.0
    %459 = vmatprep.subr.mxu0 0.0
    %460 = vmatpush1.msra.mxu0 0.0
    %461 = vmatprep.subr.mxu0 0.0
    %462 = vmatpush1.msra.mxu0 0.0
    %463 = vmatprep.subr.mxu0 0.0
    %464 = vmatpush1.msra.mxu0 0.0
    %465 = vmatprep.mubr.f32.mxu0 0.0
    %466 = vmatmul.mubr.f32.gmra.mrb[0].mxu0 %v399
    %v467 = vpop.f32.mrb[0].mxu0
    %v468 = vadd.f32 0.0, %v467
    %v469 = vpop.f32.mrb[0].mxu0
    %470 = vdwg.mxu0
    %v471 = vadd.f32 %v83, %v468
    %v472 = vtanh.pop %v471
    %v474 = vsel %vm97, %v472, 0
    %476 = vmatprep.subr.mxu0 0.0
    %477 = vmatpush1.msra.mxu0 %v29
    %478 = vmatprep.subr.mxu0 0.0
    %479 = vmatpush1.msra.mxu0 %v30
    %480 = vmatprep.subr.mxu0 0.0
    %481 = vmatpush1.msra.mxu0 %v31
    %482 = vmatprep.subr.mxu0 0.0
    %483 = vmatpush1.msra.mxu0 %v32
    %484 = vmatprep.subr.mxu0 0.0
    %485 = vmatpush1.msra.mxu0 0.0
    %486 = vmatprep.subr.mxu0 0.0
    %487 = vmatpush1.msra.mxu0 0.0
    %488 = vmatprep.subr.mxu0 0.0
    %489 = vmatpush1.msra.mxu0 0.0
    %490 = vmatprep.subr.mxu0 0.0
    %491 = vmatpush1.msra.mxu0 0.0
    %492 = vmatprep.subr.mxu0 0.0
    %493 = vmatpush1.msra.mxu0 0.0
    %494 = vmatprep.subr.mxu0 0.0
    %495 = vmatpush1.msra.mxu0 0.0
    %496 = vmatprep.subr.mxu0 0.0
    %497 = vmatpush1.msra.mxu0 0.0
    %498 = vmatprep.subr.mxu0 0.0
    %499 = vmatpush1.msra.mxu0 0.0
    %500 = vmatprep.subr.mxu0 0.0
    %501 = vmatpush1.msra.mxu0 0.0
    %502 = vmatprep.subr.mxu0 0.0
    %503 = vmatpush1.msra.mxu0 0.0
    %504 = vmatprep.subr.mxu0 0.0
    %505 = vmatpush1.msra.mxu0 0.0
    %506 = vmatprep.subr.mxu0 0.0
    %507 = vmatpush1.msra.mxu0 0.0
    %508 = vmatprep.subr.mxu0 0.0
    %509 = vmatpush1.msra.mxu0 0.0
    %510 = vmatprep.subr.mxu0 0.0
    %511 = vmatpush1.msra.mxu0 0.0
    %512 = vmatprep.subr.mxu0 0.0
    %513 = vmatpush1.msra.mxu0 0.0
    %514 = vmatprep.subr.mxu0 0.0
    %515 = vmatpush1.msra.mxu0 0.0
    %516 = vmatprep.subr.mxu0 0.0
    %517 = vmatpush1.msra.mxu0 0.0
    %518 = vmatprep.subr.mxu0 0.0
    %519 = vmatpush1.msra.mxu0 0.0
    %520 = vmatprep.subr.mxu0 0.0
    %521 = vmatpush1.msra.mxu0 0.0
    %522 = vmatprep.subr.mxu0 0.0
    %523 = vmatpush1.msra.mxu0 0.0
    %524 = vmatprep.subr.mxu0 0.0
    %525 = vmatpush1.msra.mxu0 0.0
    %526 = vmatprep.subr.mxu0 0.0
    %527 = vmatpush1.msra.mxu0 0.0
    %528 = vmatprep.subr.mxu0 0.0
    %529 = vmatpush1.msra.mxu0 0.0
    %530 = vmatprep.subr.mxu0 0.0
    %531 = vmatpush1.msra.mxu0 0.0
    %532 = vmatprep.subr.mxu0 0.0
    %533 = vmatpush1.msra.mxu0 0.0
    %534 = vmatprep.subr.mxu0 0.0
    %535 = vmatpush1.msra.mxu0 0.0
    %536 = vmatprep.subr.mxu0 0.0
    %537 = vmatpush1.msra.mxu0 0.0
    %538 = vmatprep.subr.mxu0 0.0
    %539 = vmatpush1.msra.mxu0 0.0
    %540 = vmatprep.mubr.f32.mxu0 0.0
    %541 = vmatmul.mubr.f32.gmra.mrb[0].mxu0 %v474
    %v542 = vpop.f32.mrb[0].mxu0
    %v543 = vadd.f32 0.0, %v542
    %v544 = vpop.f32.mrb[0].mxu0
    %545 = vdwg.mxu0
    %v546 = vadd.f32 %v89, %v543
    %v547 = vtanh.pop %v546
    %v549 = vsel %vm97, %v547, 0
    %551 = vmatprep.subr.mxu0 0.0
    %552 = vmatpush1.msra.mxu0 %v29
    %553 = vmatprep.subr.mxu0 0.0
    %554 = vmatpush1.msra.mxu0 %v30
    %555 = vmatprep.subr.mxu0 0.0
    %556 = vmatpush1.msra.mxu0 %v31
    %557 = vmatprep.subr.mxu0 0.0
    %558 = vmatpush1.msra.mxu0 %v32
    %559 = vmatprep.subr.mxu0 0.0
    %560 = vmatpush1.msra.mxu0 0.0
    %561 = vmatprep.subr.mxu0 0.0
    %562 = vmatpush1.msra.mxu0 0.0
    %563 = vmatprep.subr.mxu0 0.0
    %564 = vmatpush1.msra.mxu0 0.0
    %565 = vmatprep.subr.mxu0 0.0
    %566 = vmatpush1.msra.mxu0 0.0
    %567 = vmatprep.subr.mxu0 0.0
    %568 = vmatpush1.msra.mxu0 0.0
    %569 = vmatprep.subr.mxu0 0.0
    %570 = vmatpush1.msra.mxu0 0.0
    %571 = vmatprep.subr.mxu0 0.0
    %572 = vmatpush1.msra.mxu0 0.0
    %573 = vmatprep.subr.mxu0 0.0
    %574 = vmatpush1.msra.mxu0 0.0
    %575 = vmatprep.subr.mxu0 0.0
    %576 = vmatpush1.msra.mxu0 0.0
    %577 = vmatprep.subr.mxu0 0.0
    %578 = vmatpush1.msra.mxu0 0.0
    %579 = vmatprep.subr.mxu0 0.0
    %580 = vmatpush1.msra.mxu0 0.0
    %581 = vmatprep.subr.mxu0 0.0
    %582 = vmatpush1.msra.mxu0 0.0
    %583 = vmatprep.subr.mxu0 0.0
    %584 = vmatpush1.msra.mxu0 0.0
    %585 = vmatprep.subr.mxu0 0.0
    %586 = vmatpush1.msra.mxu0 0.0
    %587 = vmatprep.subr.mxu0 0.0
    %588 = vmatpush1.msra.mxu0 0.0
    %589 = vmatprep.subr.mxu0 0.0
    %590 = vmatpush1.msra.mxu0 0.0
    %591 = vmatprep.subr.mxu0 0.0
    %592 = vmatpush1.msra.mxu0 0.0
    %593 = vmatprep.subr.mxu0 0.0
    %594 = vmatpush1.msra.mxu0 0.0
    %595 = vmatprep.subr.mxu0 0.0
    %596 = vmatpush1.msra.mxu0 0.0
    %597 = vmatprep.subr.mxu0 0.0
    %598 = vmatpush1.msra.mxu0 0.0
    %599 = vmatprep.subr.mxu0 0.0
    %600 = vmatpush1.msra.mxu0 0.0
    %601 = vmatprep.subr.mxu0 0.0
    %602 = vmatpush1.msra.mxu0 0.0
    %603 = vmatprep.subr.mxu0 0.0
    %604 = vmatpush1.msra.mxu0 0.0
    %605 = vmatprep.subr.mxu0 0.0
    %606 = vmatpush1.msra.mxu0 0.0
    %607 = vmatprep.subr.mxu0 0.0
    %608 = vmatpush1.msra.mxu0 0.0
    %609 = vmatprep.subr.mxu0 0.0
    %610 = vmatpush1.msra.mxu0 0.0
    %611 = vmatprep.subr.mxu0 0.0
    %612 = vmatpush1.msra.mxu0 0.0
    %613 = vmatprep.subr.mxu0 0.0
    %614 = vmatpush1.msra.mxu0 0.0
    %615 = vmatprep.mubr.f32.mxu0 0.0
    %616 = vmatmul.mubr.f32.gmra.mrb[0].mxu0 %v549
    %v617 = vpop.f32.mrb[0].mxu0
    %v618 = vadd.f32 0.0, %v617
    %v619 = vpop.f32.mrb[0].mxu0
    %620 = vdwg.mxu0
    %v621 = vadd.f32 %v95, %v618
    %v622 = vtanh.pop %v621
    %v624 = vlaneseq
    %v625 = vshrl.u32 %v624, 7
    %v626 = vsub.s32 0, %v625
    %v627 = vrot.slane %v33, %v626
    %v629 = vmul.f32 %v622, %v627
    %v630 = vsel %vm97, %v629, 0.0
    %631 = vadd.xlane.f32.xlu0 %v630
    %v632 = vpop.xlane.xlu0 %631
    %634 = vrot.lane.b32.xlu0 %v168, 96
    %v635 = vpop.permute.xlu0 %634
    %638 = vrot.lane.b32.xlu0 %v243, 97
    %v639 = vpop.permute.xlu0 %638
    %642 = vrot.lane.b32.xlu0 %v318, 98
    %v643 = vpop.permute.xlu0 %642
    %646 = vrot.lane.b32.xlu0 %v393, 99
    %v647 = vpop.permute.xlu0 %646
    %650 = vrot.lane.b32.xlu0 %v468, 100
    %v651 = vpop.permute.xlu0 %650
    %654 = vrot.lane.b32.xlu0 %v543, 101
    %v655 = vpop.permute.xlu0 %654
    %658 = vrot.lane.b32.xlu0 %v618, 102
    %v659 = vpop.permute.xlu0 %658
    %vm661 = vcmask 7168
    %v662 = vsel %vm661, %v635, %v639
    %vm663 = vcmask 15360
    %v664 = vsel %vm663, %v662, %v643
    %vm665 = vcmask 23552
    %v666 = vsel %vm665, %v664, %v647
    %vm667 = vcmask 31744
    %v668 = vsel %vm667, %v666, %v651
    %vm669 = vcmask 39936
    %v670 = vsel %vm669, %v668, %v655
    %vm671 = vcmask 48128
    %v672 = vsel %vm671, %v670, %v659
    %vm673 = vcmask 56320
    %v674 = vsel %vm673, %v672, %v632
    %v676 = vlaneseq
    %v677 = vshrl.u32 %v676, 7
    %v678 = vsub.s32 0, %v677
    %v679 = vrot.slane %v34, %v678
    %680 = vset.pattern.permute.xlu0 0
    %681 = vperm.xlu0 %680, %v679
    %v682 = vpop.permute.xlu0 %681
    %v684 = vadd.f32 %v674, %v682
    %vm685 = vcmask 64512
    %686 = vst.msk [vmem:[#allocation3] sm:$0xff] %vm685, %v684
    // Predicated region
    $region26: #{model_forward.1} parent=1 // pred_check
      _
    $region27: #{model_forward.1} parent=1 // pred_check_branch
      %688 = sbr.rel (0) target = $region29
    $region28: #{model_forward.1} parent=1 // pred_region
      %s690 = ssub.s32 128, 128
      %691 = vsyncadd [#allocation4], %s690
      %s693 = sshll.u32 [#allocation3], 4
      %s694 = int_to_ptr.vmem [resolvable:$true] %s693
      %696 = dma.vmem_to_hbm [thread:$0]  %s694, 128, %s6, [#allocation4]
    $region29: #{model_forward.1} parent=1 // pred_fallthru
      _
    // Predicated region
    $region30: #{model_forward.1} parent=1 // pred_check
      _
    $region31: #{model_forward.1} parent=1 // pred_check_branch
      %698 = sbr.rel (0) target = $region33
    $region32: #{model_forward.1} parent=1 // pred_region
      %699 = dma.done [#allocation4], 128
    $region33: #{model_forward.1} parent=1 // pred_fallthru
      _
    %700 = vsyncpa [#allocation4], 1

</llo_original>
